<compile_context>
chip_gen: v7x
topology: tpu7x:2x2x1
jax: 0.10.0
libtpu: 0.0.40
codegen_flags: <defaults>
</compile_context>

<pallas_src>
import jax
import jax.numpy as jnp
from jax.experimental import pallas as pl
from jax.experimental.pallas import tpu as pltpu


def _sigmoid(x):
    # Exact identity sigmoid(x) = 0.5*tanh(0.5*x) + 0.5 -- one EUP transcendental
    # plus cheap VPU mul/add, instead of exp + f32 divide.
    return 0.5 * jnp.tanh(0.5 * x) + 0.5


def winenet_kernel(xt_ref, w1_ref, b1_ref, w2_ref, b2_ref, w3_ref, b3_ref, ot_ref):
    # All activations are (features, batch): batch on the 128-lane axis.
    xt = xt_ref[...]                      # (2, TB)
    w1 = w1_ref[...]                      # (H, 2)   -- PyTorch (out, in) layout

    # fc1 + sigmoid: K=2 contraction done on the VPU as two broadcast FMAs
    # (the MXU would be 2/256 utilized on this layer).
    h1 = (w1[:, 0:1] * xt[0:1, :]
          + w1[:, 1:2] * xt[1:2, :]
          + b1_ref[...])                  # (H, TB)
    h1 = _sigmoid(h1)

    # fc2 + sigmoid: (H, H) x (H, TB) on the MXU.
    h2 = jnp.dot(w2_ref[...], h1, preferred_element_type=jnp.float32) + b2_ref[...]
    h2 = _sigmoid(h2)                     # (H, TB)

    # fc3: (3, H) x (H, TB) -> (3, TB).  Result is already lane-dense in the
    # batch dim, so the store + writeback are dense (12 B per batch row).
    ot_ref[...] = (
        jnp.dot(w3_ref[...], h2, preferred_element_type=jnp.float32) + b3_ref[...]
    )                                     # (3, TB)


def winenet_forward(x, params, tile_b=8192, core_parallel=False):
    """x: (B, 2) float32.  params: PyTorch-layout weights (out, in) / biases (out, 1).

    Returns (B, 3) logits.  Set core_parallel=True on v7x (2 TensorCores) to
    shard the batch grid across cores.
    """
    B = x.shape[0]
    H = params["w1"].shape[0]
    n_out = params["w3"].shape[0]

    # (B, 2) -> (2, B): puts the batch on the lane axis so the x DMA is dense
    # (a (tile_b, 2) block would be 2/128 lane-sparse: 64x VMEM inflation and
    # 8-byte-strided DMA rows).  Costs only 16 B/row of wrapper HBM traffic.
    xt = x.T

    # Batch tiling: one exact-size block if B fits in a tile, else 128-lane
    # multiples with a cdiv grid (no padding of x; OOB output lanes of the
    # last block are dropped by Pallas).
    if B <= tile_b:
        tb = B
        grid = (1,)
    else:
        tb = max(128, (tile_b // 128) * 128)
        grid = (pl.cdiv(B, tb),)

    # Weights/biases are resident in VMEM (constant index_map); x / out stream.
    def resident(shape):
        return pl.BlockSpec(shape, lambda i: (0,) * len(shape))

    batch_sem = pltpu.CORE_PARALLEL if core_parallel else "parallel"

    out_t = pl.pallas_call(
        winenet_kernel,
        out_shape=jax.ShapeDtypeStruct((n_out, B), jnp.float32),
        grid=grid,
        in_specs=[
            pl.BlockSpec((2, tb), lambda i: (0, i)),     # x^T, streamed
            resident((H, 2)), resident((H, 1)),          # W1, b1
            resident((H, H)), resident((H, 1)),          # W2, b2
            resident((n_out, H)), resident((n_out, 1)),  # W3, b3
        ],
        out_specs=pl.BlockSpec((n_out, tb), lambda i: (0, i)),
        compiler_params=pltpu.CompilerParams(
            dimension_semantics=(batch_sem,),
            # ~8 MiB actual working set at tile_b=8192, H=32; 32 MiB gives 4x
            # headroom and is valid on v5e/v6e (128 MiB) and v7x (64 MiB).
            vmem_limit_bytes=32 * 1024 * 1024,
        ),
    )(xt, params["w1"], params["b1"], params["w2"], params["b2"],
      params["w3"], params["b3"])

    # (3, B) -> (B, 3) to match the PyTorch module's output layout (12 B/row).
    return out_t.T


def init_params(key, n_hidden_neurons):
    """Deterministic init mimicking torch.nn.Linear's U(-1/sqrt(fan_in), +) scheme.

    Weights stored in PyTorch (out_features, in_features) layout; biases as
    (out_features, 1) columns (the kernel's native transposed orientation).
    """
    ks = jax.random.split(key, 6)

    def linear(kw, kb, fan_in, fan_out):
        bound = 1.0 / jnp.sqrt(float(fan_in))
        w = jax.random.uniform(kw, (fan_out, fan_in), jnp.float32, -bound, bound)
        b = jax.random.uniform(kb, (fan_out, 1), jnp.float32, -bound, bound)
        return w, b

    w1, b1 = linear(ks[0], ks[1], 2, n_hidden_neurons)
    w2, b2 = linear(ks[2], ks[3], n_hidden_neurons, n_hidden_neurons)
    w3, b3 = linear(ks[4], ks[5], n_hidden_neurons, 3)
    return {"w1": w1, "b1": b1, "w2": w2, "b2": b2, "w3": w3, "b3": b3}


def winenet_reference(x, params):
    """Pure-JAX reference (standard orientation) for correctness checking."""
    h1 = jax.nn.sigmoid(x @ params["w1"].T + params["b1"].T)
    h2 = jax.nn.sigmoid(h1 @ params["w2"].T + params["b2"].T)
    return h2 @ params["w3"].T + params["b3"].T


if __name__ == "__main__":
    key = jax.random.PRNGKey(0)
    k_x, k_p, k_x2 = jax.random.split(key, 3)

    n_hidden_neurons = 32
    params = init_params(k_p, n_hidden_neurons)

    # Small batch (single exact-size block).
    B = 8
    x = jax.random.normal(k_x, (B, 2), dtype=jnp.float32)
    out = jax.block_until_ready(winenet_forward(x, params))
    ref = winenet_reference(x, params)
    assert out.shape == (B, 3)
    assert jnp.allclose(out, ref, atol=1e-4, rtol=1e-4), "mismatch vs reference (B=8)"

    # Non-multiple batch with multiple grid tiles (exercises cdiv grid + the
    # partially out-of-bounds last block).
    B2 = 300
    x2 = jax.random.normal(k_x2, (B2, 2), dtype=jnp.float32)
    out2 = jax.block_until_ready(winenet_forward(x2, params, tile_b=128))
    ref2 = winenet_reference(x2, params)
    assert out2.shape == (B2, 3)
    assert jnp.allclose(out2, ref2, atol=1e-4, rtol=1e-4), "mismatch vs reference (B=300)"

    print("KERNEL_OK")
</pallas_src>

<mosaic_0001>
module attributes {stable_mosaic.version = 11 : i64} {
  func.func @winenet_kernel(%arg0: i32, %arg1: memref<2x8xf32, #tpu.memory_space<vmem>>, %arg2: memref<32x2xf32, #tpu.memory_space<vmem>>, %arg3: memref<32x1xf32, #tpu.memory_space<vmem>>, %arg4: memref<32x32xf32, #tpu.memory_space<vmem>>, %arg5: memref<32x1xf32, #tpu.memory_space<vmem>>, %arg6: memref<3x32xf32, #tpu.memory_space<vmem>>, %arg7: memref<3x1xf32, #tpu.memory_space<vmem>>, %arg8: memref<3x8xf32, #tpu.memory_space<vmem>>) attributes {dimension_semantics = [#tpu.dimension_semantics<parallel>], iteration_bounds = array<i64: 1>, scalar_prefetch = 0 : i64, scratch_operands = 0 : i64, tpu.core_type = #tpu.core_type<tc>, window_params = [{transform_indices = @transform_0, window_bounds = array<i64: 2, 8>}, {pipeline_mode = #tpu.pipeline_mode<synchronous>, transform_indices = @transform_1, window_bounds = array<i64: 32, 2>}, {pipeline_mode = #tpu.pipeline_mode<synchronous>, transform_indices = @transform_2, window_bounds = array<i64: 32, 1>}, {pipeline_mode = #tpu.pipeline_mode<synchronous>, transform_indices = @transform_3, window_bounds = array<i64: 32, 32>}, {pipeline_mode = #tpu.pipeline_mode<synchronous>, transform_indices = @transform_4, window_bounds = array<i64: 32, 1>}, {pipeline_mode = #tpu.pipeline_mode<synchronous>, transform_indices = @transform_5, window_bounds = array<i64: 3, 32>}, {pipeline_mode = #tpu.pipeline_mode<synchronous>, transform_indices = @transform_6, window_bounds = array<i64: 3, 1>}, {transform_indices = @transform_7, window_bounds = array<i64: 3, 8>}]} {
    %c0 = arith.constant 0 : index
    %c0_0 = arith.constant 0 : index
    %0 = vector.load %arg1[%c0, %c0_0] : memref<2x8xf32, #tpu.memory_space<vmem>>, vector<2x8xf32>
    %c0_1 = arith.constant 0 : index
    %c0_2 = arith.constant 0 : index
    %1 = vector.load %arg2[%c0_1, %c0_2] : memref<32x2xf32, #tpu.memory_space<vmem>>, vector<32x2xf32>
    %2 = vector.extract_strided_slice %1 {offsets = [0, 0], sizes = [32, 1], strides = [1, 1]} : vector<32x2xf32> to vector<32x1xf32>
    %3 = vector.extract_strided_slice %0 {offsets = [0, 0], sizes = [1, 8], strides = [1, 1]} : vector<2x8xf32> to vector<1x8xf32>
    %4 = vector.broadcast %2 : vector<32x1xf32> to vector<32x8xf32>
    %5 = vector.broadcast %3 : vector<1x8xf32> to vector<32x8xf32>
    %6 = arith.mulf %4, %5 : vector<32x8xf32>
    %7 = vector.extract_strided_slice %1 {offsets = [0, 1], sizes = [32, 1], strides = [1, 1]} : vector<32x2xf32> to vector<32x1xf32>
    %8 = vector.extract_strided_slice %0 {offsets = [1, 0], sizes = [1, 8], strides = [1, 1]} : vector<2x8xf32> to vector<1x8xf32>
    %9 = vector.broadcast %7 : vector<32x1xf32> to vector<32x8xf32>
    %10 = vector.broadcast %8 : vector<1x8xf32> to vector<32x8xf32>
    %11 = arith.mulf %9, %10 : vector<32x8xf32>
    %12 = arith.addf %6, %11 : vector<32x8xf32>
    %c0_3 = arith.constant 0 : index
    %c0_4 = arith.constant 0 : index
    %13 = vector.load %arg3[%c0_3, %c0_4] : memref<32x1xf32, #tpu.memory_space<vmem>>, vector<32x1xf32>
    %14 = vector.broadcast %13 : vector<32x1xf32> to vector<32x8xf32>
    %15 = arith.addf %12, %14 : vector<32x8xf32>
    %cst = arith.constant 5.000000e-01 : f32
    %16 = vector.broadcast %cst : f32 to vector<32x8xf32>
    %17 = arith.mulf %16, %15 : vector<32x8xf32>
    %18 = math.tanh %17 : vector<32x8xf32>
    %cst_5 = arith.constant 5.000000e-01 : f32
    %19 = vector.broadcast %cst_5 : f32 to vector<32x8xf32>
    %20 = arith.mulf %19, %18 : vector<32x8xf32>
    %cst_6 = arith.constant 5.000000e-01 : f32
    %21 = vector.broadcast %cst_6 : f32 to vector<32x8xf32>
    %22 = arith.addf %20, %21 : vector<32x8xf32>
    %c0_7 = arith.constant 0 : index
    %c0_8 = arith.constant 0 : index
    %23 = vector.load %arg4[%c0_7, %c0_8] : memref<32x32xf32, #tpu.memory_space<vmem>>, vector<32x32xf32>
    %cst_9 = arith.constant dense<0.000000e+00> : vector<32x8xf32>
    %24 = tpu.matmul %23, %22, %cst_9 {dimension_numbers = #tpu.dot_dimension_numbers<[1], [0], [0], [1], [0, 0, 1, 1], [], []>} : vector<32x32xf32>, vector<32x8xf32>, vector<32x8xf32> -> vector<32x8xf32>
    %c0_10 = arith.constant 0 : index
    %c0_11 = arith.constant 0 : index
    %25 = vector.load %arg5[%c0_10, %c0_11] : memref<32x1xf32, #tpu.memory_space<vmem>>, vector<32x1xf32>
    %26 = vector.broadcast %25 : vector<32x1xf32> to vector<32x8xf32>
    %27 = arith.addf %24, %26 : vector<32x8xf32>
    %cst_12 = arith.constant 5.000000e-01 : f32
    %28 = vector.broadcast %cst_12 : f32 to vector<32x8xf32>
    %29 = arith.mulf %28, %27 : vector<32x8xf32>
    %30 = math.tanh %29 : vector<32x8xf32>
    %cst_13 = arith.constant 5.000000e-01 : f32
    %31 = vector.broadcast %cst_13 : f32 to vector<32x8xf32>
    %32 = arith.mulf %31, %30 : vector<32x8xf32>
    %cst_14 = arith.constant 5.000000e-01 : f32
    %33 = vector.broadcast %cst_14 : f32 to vector<32x8xf32>
    %34 = arith.addf %32, %33 : vector<32x8xf32>
    %c0_15 = arith.constant 0 : index
    %c0_16 = arith.constant 0 : index
    %35 = vector.load %arg6[%c0_15, %c0_16] : memref<3x32xf32, #tpu.memory_space<vmem>>, vector<3x32xf32>
    %cst_17 = arith.constant dense<0.000000e+00> : vector<3x8xf32>
    %36 = tpu.matmul %35, %34, %cst_17 {dimension_numbers = #tpu.dot_dimension_numbers<[1], [0], [0], [1], [0, 0, 1, 1], [], []>} : vector<3x32xf32>, vector<32x8xf32>, vector<3x8xf32> -> vector<3x8xf32>
    %c0_18 = arith.constant 0 : index
    %c0_19 = arith.constant 0 : index
    %37 = vector.load %arg7[%c0_18, %c0_19] : memref<3x1xf32, #tpu.memory_space<vmem>>, vector<3x1xf32>
    %38 = vector.broadcast %37 : vector<3x1xf32> to vector<3x8xf32>
    %39 = arith.addf %36, %38 : vector<3x8xf32>
    %c0_20 = arith.constant 0 : index
    %c0_21 = arith.constant 0 : index
    %40 = vector.load %arg8[%c0_20, %c0_21] : memref<3x8xf32, #tpu.memory_space<vmem>>, vector<3x8xf32>
    tpu.vector_store %arg8[%c0_20, %c0_21], %39 {strides = array<i32>} : memref<3x8xf32, #tpu.memory_space<vmem>>, vector<3x8xf32>,
    return
  }
  func.func @transform_0(%arg0: i32) -> (i32, i32) {
    %c0_i32 = arith.constant 0 : i32
    %c0_i32_0 = arith.constant 0 : i32
    return %c0_i32, %arg0 : i32, i32
  }
  func.func @transform_1(%arg0: i32) -> (i32, i32) {
    %c0_i32 = arith.constant 0 : i32
    %c0_i32_0 = arith.constant 0 : i32
    %c0_i32_1 = arith.constant 0 : i32
    return %c0_i32, %c0_i32_0 : i32, i32
  }
  func.func @transform_2(%arg0: i32) -> (i32, i32) {
    %c0_i32 = arith.constant 0 : i32
    %c0_i32_0 = arith.constant 0 : i32
    %c0_i32_1 = arith.constant 0 : i32
    return %c0_i32, %c0_i32_0 : i32, i32
  }
  func.func @transform_3(%arg0: i32) -> (i32, i32) {
    %c0_i32 = arith.constant 0 : i32
    %c0_i32_0 = arith.constant 0 : i32
    %c0_i32_1 = arith.constant 0 : i32
    return %c0_i32, %c0_i32_0 : i32, i32
  }
  func.func @transform_4(%arg0: i32) -> (i32, i32) {
    %c0_i32 = arith.constant 0 : i32
    %c0_i32_0 = arith.constant 0 : i32
    %c0_i32_1 = arith.constant 0 : i32
    return %c0_i32, %c0_i32_0 : i32, i32
  }
  func.func @transform_5(%arg0: i32) -> (i32, i32) {
    %c0_i32 = arith.constant 0 : i32
    %c0_i32_0 = arith.constant 0 : i32
    %c0_i32_1 = arith.constant 0 : i32
    return %c0_i32, %c0_i32_0 : i32, i32
  }
  func.func @transform_6(%arg0: i32) -> (i32, i32) {
    %c0_i32 = arith.constant 0 : i32
    %c0_i32_0 = arith.constant 0 : i32
    %c0_i32_1 = arith.constant 0 : i32
    return %c0_i32, %c0_i32_0 : i32, i32
  }
  func.func @transform_7(%arg0: i32) -> (i32, i32) {
    %c0_i32 = arith.constant 0 : i32
    %c0_i32_0 = arith.constant 0 : i32
    return %c0_i32, %arg0 : i32, i32
  }
}

</mosaic_0001>

<llo_original>
// kernel: tpu_custom_call.1
$region0: #{tpu_custom_call.1}
  #allocation0 [shape = 'u32[]', space=smem, size = 0x4, offset = 0x4, fixed_abs, tag = 'smem constant byte address 0x4 - core index']
  #allocation1 [shape = 'u32[144,128]{1,0:T(1,128)}', space=vmem, size = 0x12000, scoped, tag = 'internal scratch']
  %s0 = inlined_call_operand.vmem [shape: f32[2,8], index: 0, kind: input, shape index: {}]
  %s1 = inlined_call_operand.vmem [shape: f32[32,2], index: 1, kind: input, shape index: {}]
  %s2 = inlined_call_operand.vmem [shape: f32[32,1], index: 2, kind: input, shape index: {}]
  %s3 = inlined_call_operand.vmem [shape: f32[32,32], index: 3, kind: input, shape index: {}]
  %s4 = inlined_call_operand.vmem [shape: f32[32,1], index: 4, kind: input, shape index: {}]
  %s5 = inlined_call_operand.vmem [shape: f32[3,32], index: 5, kind: input, shape index: {}]
  %s6 = inlined_call_operand.vmem [shape: f32[3,1], index: 6, kind: input, shape index: {}]
  %s7 = inlined_call_operand.hbm [shape: f32[3,8], index: 7, kind: output, shape index: {}]
  %s8 = sld [smem:[#allocation0]]
  $region38: #{tpu_custom_call.1} parent=0
    _
  %s10 = ssub.s32 1, %s8
  %s11 = scalar_select 0, %s10, %s8
  $region1: #{tpu_custom_call.1} parent=0
    #allocation2 [shape = 'u8[2048]{0}', space=vmem, size = 0x800, scoped, tag = 'output window, operand 0, single buffered']
    #allocation3 [shape = 's32[1]{0}', space=sflag, size = 0x4, scoped, tag = 'scoped memory for tpu_custom_call.1']
    %12 = vsyncpa [#allocation3], 0
    // Predicated region
    $region2: #{tpu_custom_call.1} parent=1 // pred_check
      _
    $region3: #{tpu_custom_call.1} parent=1 // pred_check_branch
      %14 = sbr.rel (0) target = $region5
    $region4: #{tpu_custom_call.1} parent=1 // pred_region
      _
    $region5: #{tpu_custom_call.1} parent=1 // pred_fallthru
      _
    // Predicated region
    $region6: #{tpu_custom_call.1} parent=1 // pred_check
      _
    $region7: #{tpu_custom_call.1} parent=1 // pred_check_branch
      %16 = sbr.rel (0) target = $region9
    $region8: #{tpu_custom_call.1} parent=1 // pred_region
      _
    $region9: #{tpu_custom_call.1} parent=1 // pred_fallthru
      _
    // Predicated region
    $region10: #{tpu_custom_call.1} parent=1 // pred_check
      _
    $region11: #{tpu_custom_call.1} parent=1 // pred_check_branch
      %18 = sbr.rel (0) target = $region13
    $region12: #{tpu_custom_call.1} parent=1 // pred_region
      _
    $region13: #{tpu_custom_call.1} parent=1 // pred_fallthru
      _
    // Predicated region
    $region14: #{tpu_custom_call.1} parent=1 // pred_check
      _
    $region15: #{tpu_custom_call.1} parent=1 // pred_check_branch
      %20 = sbr.rel (0) target = $region17
    $region16: #{tpu_custom_call.1} parent=1 // pred_region
      _
    $region17: #{tpu_custom_call.1} parent=1 // pred_fallthru
      _
    // Predicated region
    $region18: #{tpu_custom_call.1} parent=1 // pred_check
      _
    $region19: #{tpu_custom_call.1} parent=1 // pred_check_branch
      %22 = sbr.rel (0) target = $region21
    $region20: #{tpu_custom_call.1} parent=1 // pred_region
      _
    $region21: #{tpu_custom_call.1} parent=1 // pred_fallthru
      _
    // Predicated region
    $region22: #{tpu_custom_call.1} parent=1 // pred_check
      _
    $region23: #{tpu_custom_call.1} parent=1 // pred_check_branch
      %24 = sbr.rel (0) target = $region25
    $region24: #{tpu_custom_call.1} parent=1 // pred_region
      _
    $region25: #{tpu_custom_call.1} parent=1 // pred_fallthru
      _
    // Predicated region
    $region26: #{tpu_custom_call.1} parent=1 // pred_check
      _
    $region27: #{tpu_custom_call.1} parent=1 // pred_check_branch
      %26 = sbr.rel (0) target = $region29
    $region28: #{tpu_custom_call.1} parent=1 // pred_region
      _
    $region29: #{tpu_custom_call.1} parent=1 // pred_fallthru
      _
    %v27 = vld [vmem:[%s0] sm:$0x3]
    %v28 = vld [vmem:[%s1] sm:$0xff]
    %v29 = vld [vmem:[%s1 + $0x8] sm:$0xff]
    %v30 = vld [vmem:[%s1 + $0x10] sm:$0xff]
    %v31 = vld [vmem:[%s1 + $0x18] sm:$0xff]
    %33 = vset.pattern.permute.xlu0 0
    %34 = vperm.xlu0 %33, %v28
    %v35 = vpop.permute.xlu0 %34
    %38 = vset.pattern.permute.xlu0 0
    %39 = vperm.xlu0 %38, %v29
    %v40 = vpop.permute.xlu0 %39
    %43 = vset.pattern.permute.xlu0 0
    %44 = vperm.xlu0 %43, %v30
    %v45 = vpop.permute.xlu0 %44
    %48 = vset.pattern.permute.xlu0 0
    %49 = vperm.xlu0 %48, %v31
    %v50 = vpop.permute.xlu0 %49
    %v52 = vlaneseq
    %v53 = vshrl.u32 %v52, 7
    %v54 = vsub.s32 0, %v53
    %v55 = vrot.slane %v27, %v54
    %v56 = vmul.f32 %v35, %v55
    %v57 = vmul.f32 %v40, %v55
    %v58 = vmul.f32 %v45, %v55
    %v59 = vmul.f32 %v50, %v55
    %60 = vset.pattern.permute.xlu0 1
    %61 = vperm.xlu0 %60, %v28
    %v62 = vpop.permute.xlu0 %61
    %64 = vset.pattern.permute.xlu0 1
    %65 = vperm.xlu0 %64, %v29
    %v66 = vpop.permute.xlu0 %65
    %68 = vset.pattern.permute.xlu0 1
    %69 = vperm.xlu0 %68, %v30
    %v70 = vpop.permute.xlu0 %69
    %72 = vset.pattern.permute.xlu0 1
    %73 = vperm.xlu0 %72, %v31
    %v74 = vpop.permute.xlu0 %73
    %v76 = vlaneseq
    %v77 = vshrl.u32 %v76, 7
    %v78 = vsub.s32 1, %v77
    %v79 = vrot.slane %v27, %v78
    %v80 = vmul.f32 %v62, %v79
    %v81 = vmul.f32 %v66, %v79
    %v82 = vmul.f32 %v70, %v79
    %v83 = vmul.f32 %v74, %v79
    %v84 = vadd.f32 %v56, %v80
    %v85 = vadd.f32 %v57, %v81
    %v86 = vadd.f32 %v58, %v82
    %v87 = vadd.f32 %v59, %v83
    %v88 = vld [vmem:[%s2] sm:$0xff]
    %v89 = vld [vmem:[%s2 + $0x8] sm:$0xff]
    %v90 = vld [vmem:[%s2 + $0x10] sm:$0xff]
    %v91 = vld [vmem:[%s2 + $0x18] sm:$0xff]
    %93 = vset.pattern.permute.xlu0 0
    %94 = vperm.xlu0 %93, %v88
    %v95 = vpop.permute.xlu0 %94
    %98 = vset.pattern.permute.xlu0 0
    %99 = vperm.xlu0 %98, %v89
    %v100 = vpop.permute.xlu0 %99
    %103 = vset.pattern.permute.xlu0 0
    %104 = vperm.xlu0 %103, %v90
    %v105 = vpop.permute.xlu0 %104
    %108 = vset.pattern.permute.xlu0 0
    %109 = vperm.xlu0 %108, %v91
    %v110 = vpop.permute.xlu0 %109
    %v112 = vadd.f32 %v84, %v95
    %v113 = vadd.f32 %v85, %v100
    %v114 = vadd.f32 %v86, %v105
    %v115 = vadd.f32 %v87, %v110
    %v116 = vmul.f32 %v112, 0.5
    %v117 = vmul.f32 %v113, 0.5
    %v118 = vmul.f32 %v114, 0.5
    %v119 = vmul.f32 %v115, 0.5
    %v120 = vtanh.pop %v116
    %v121 = vtanh.pop %v117
    %v122 = vtanh.pop %v118
    %v123 = vtanh.pop %v119
    %v124 = vmul.f32 %v120, 0.5
    %v125 = vmul.f32 %v121, 0.5
    %v126 = vmul.f32 %v122, 0.5
    %v127 = vmul.f32 %v123, 0.5
    %v128 = vadd.f32 %v124, 0.5
    %v129 = vadd.f32 %v125, 0.5
    %v130 = vadd.f32 %v126, 0.5
    %v131 = vadd.f32 %v127, 0.5
    %v132 = vld [vmem:[%s3] sm:$0xff]
    %v133 = vld [vmem:[%s3 + $0x8] sm:$0xff]
    %v134 = vld [vmem:[%s3 + $0x10] sm:$0xff]
    %v135 = vld [vmem:[%s3 + $0x18] sm:$0xff]
    %v136 = vld [vmem:[%s4] sm:$0xff]
    %v137 = vld [vmem:[%s4 + $0x8] sm:$0xff]
    %v138 = vld [vmem:[%s4 + $0x10] sm:$0xff]
    %v139 = vld [vmem:[%s4 + $0x18] sm:$0xff]
    %141 = vset.pattern.permute.xlu0 0
    %142 = vperm.xlu0 %141, %v136
    %v143 = vpop.permute.xlu0 %142
    %146 = vset.pattern.permute.xlu0 0
    %147 = vperm.xlu0 %146, %v137
    %v148 = vpop.permute.xlu0 %147
    %151 = vset.pattern.permute.xlu0 0
    %152 = vperm.xlu0 %151, %v138
    %v153 = vpop.permute.xlu0 %152
    %156 = vset.pattern.permute.xlu0 0
    %157 = vperm.xlu0 %156, %v139
    %v158 = vpop.permute.xlu0 %157
    %vm160 = vcmask 261120
    %v162 = vsel %vm160, %v132, 0
    %v165 = vsel %vm160, %v133, 0
    %v168 = vsel %vm160, %v134, 0
    %v171 = vsel %vm160, %v135, 0
    %173 = vmatprep.subr.mxu0 0.0
    %174 = vmatpush1.msra.mxu0 %v128
    %175 = vmatprep.subr.mxu0 0.0
    %176 = vmatpush1.msra.mxu0 %v129
    %177 = vmatprep.subr.mxu0 0.0
    %178 = vmatpush1.msra.mxu0 %v130
    %179 = vmatprep.subr.mxu0 0.0
    %180 = vmatpush1.msra.mxu0 %v131
    %181 = vmatprep.subr.mxu0 0.0
    %182 = vmatpush1.msra.mxu0 0.0
    %183 = vmatprep.subr.mxu0 0.0
    %184 = vmatpush1.msra.mxu0 0.0
    %185 = vmatprep.subr.mxu0 0.0
    %186 = vmatpush1.msra.mxu0 0.0
    %187 = vmatprep.subr.mxu0 0.0
    %188 = vmatpush1.msra.mxu0 0.0
    %189 = vmatprep.subr.mxu0 0.0
    %190 = vmatpush1.msra.mxu0 0.0
    %191 = vmatprep.subr.mxu0 0.0
    %192 = vmatpush1.msra.mxu0 0.0
    %193 = vmatprep.subr.mxu0 0.0
    %194 = vmatpush1.msra.mxu0 0.0
    %195 = vmatprep.subr.mxu0 0.0
    %196 = vmatpush1.msra.mxu0 0.0
    %197 = vmatprep.subr.mxu0 0.0
    %198 = vmatpush1.msra.mxu0 0.0
    %199 = vmatprep.subr.mxu0 0.0
    %200 = vmatpush1.msra.mxu0 0.0
    %201 = vmatprep.subr.mxu0 0.0
    %202 = vmatpush1.msra.mxu0 0.0
    %203 = vmatprep.subr.mxu0 0.0
    %204 = vmatpush1.msra.mxu0 0.0
    %205 = vmatprep.subr.mxu0 0.0
    %206 = vmatpush1.msra.mxu0 0.0
    %207 = vmatprep.subr.mxu0 0.0
    %208 = vmatpush1.msra.mxu0 0.0
    %209 = vmatprep.subr.mxu0 0.0
    %210 = vmatpush1.msra.mxu0 0.0
    %211 = vmatprep.subr.mxu0 0.0
    %212 = vmatpush1.msra.mxu0 0.0
    %213 = vmatprep.subr.mxu0 0.0
    %214 = vmatpush1.msra.mxu0 0.0
    %215 = vmatprep.subr.mxu0 0.0
    %216 = vmatpush1.msra.mxu0 0.0
    %217 = vmatprep.subr.mxu0 0.0
    %218 = vmatpush1.msra.mxu0 0.0
    %219 = vmatprep.subr.mxu0 0.0
    %220 = vmatpush1.msra.mxu0 0.0
    %221 = vmatprep.subr.mxu0 0.0
    %222 = vmatpush1.msra.mxu0 0.0
    %223 = vmatprep.subr.mxu0 0.0
    %224 = vmatpush1.msra.mxu0 0.0
    %225 = vmatprep.subr.mxu0 0.0
    %226 = vmatpush1.msra.mxu0 0.0
    %227 = vmatprep.subr.mxu0 0.0
    %228 = vmatpush1.msra.mxu0 0.0
    %229 = vmatprep.subr.mxu0 0.0
    %230 = vmatpush1.msra.mxu0 0.0
    %231 = vmatprep.subr.mxu0 0.0
    %232 = vmatpush1.msra.mxu0 0.0
    %233 = vmatprep.subr.mxu0 0.0
    %234 = vmatpush1.msra.mxu0 0.0
    %235 = vmatprep.subr.mxu0 0.0
    %236 = vmatpush1.msra.mxu0 0.0
    %237 = vmatprep.mubr.f32.mxu0 0.0
    %238 = vmatmul.mubr.f32.gmra.mrb[0].mxu0 %v162
    %v239 = vpop.f32.mrb[0].mxu0
    %v240 = vadd.f32 %v143, %v239
    %v241 = vpop.f32.mrb[0].mxu0
    %242 = vmatprep.mubr.f32.mxu0 0.0
    %243 = vmatmul.mubr.f32.gmra.mrb[0].mxu0 %v165
    %v244 = vpop.f32.mrb[0].mxu0
    %v245 = vadd.f32 %v148, %v244
    %v246 = vpop.f32.mrb[0].mxu0
    %247 = vmatprep.mubr.f32.mxu0 0.0
    %248 = vmatmul.mubr.f32.gmra.mrb[0].mxu0 %v168
    %v249 = vpop.f32.mrb[0].mxu0
    %v250 = vadd.f32 %v153, %v249
    %v251 = vpop.f32.mrb[0].mxu0
    %252 = vmatprep.mubr.f32.mxu0 0.0
    %253 = vmatmul.mubr.f32.gmra.mrb[0].mxu0 %v171
    %v254 = vpop.f32.mrb[0].mxu0
    %v255 = vadd.f32 %v158, %v254
    %v256 = vpop.f32.mrb[0].mxu0
    %257 = vdwg.mxu0
    %v258 = vmul.f32 %v240, 0.5
    %v259 = vmul.f32 %v245, 0.5
    %v260 = vmul.f32 %v250, 0.5
    %v261 = vmul.f32 %v255, 0.5
    %v262 = vtanh.pop %v258
    %v263 = vtanh.pop %v259
    %v264 = vtanh.pop %v260
    %v265 = vtanh.pop %v261
    %v266 = vmul.f32 %v262, 0.5
    %v267 = vmul.f32 %v263, 0.5
    %v268 = vmul.f32 %v264, 0.5
    %v269 = vmul.f32 %v265, 0.5
    %v270 = vadd.f32 %v266, 0.5
    %v271 = vadd.f32 %v267, 0.5
    %v272 = vadd.f32 %v268, 0.5
    %v273 = vadd.f32 %v269, 0.5
    %v274 = vld [vmem:[%s5] sm:$0x7]
    %v275 = vld [vmem:[%s6] sm:$0x7]
    %277 = vset.pattern.permute.xlu0 0
    %278 = vperm.xlu0 %277, %v275
    %v279 = vpop.permute.xlu0 %278
    %v282 = vsel %vm160, %v274, 0
    %284 = vmatprep.subr.mxu0 0.0
    %285 = vmatpush1.msra.mxu0 %v270
    %286 = vmatprep.subr.mxu0 0.0
    %287 = vmatpush1.msra.mxu0 %v271
    %288 = vmatprep.subr.mxu0 0.0
    %289 = vmatpush1.msra.mxu0 %v272
    %290 = vmatprep.subr.mxu0 0.0
    %291 = vmatpush1.msra.mxu0 %v273
    %292 = vmatprep.subr.mxu0 0.0
    %293 = vmatpush1.msra.mxu0 0.0
    %294 = vmatprep.subr.mxu0 0.0
    %295 = vmatpush1.msra.mxu0 0.0
    %296 = vmatprep.subr.mxu0 0.0
    %297 = vmatpush1.msra.mxu0 0.0
    %298 = vmatprep.subr.mxu0 0.0
    %299 = vmatpush1.msra.mxu0 0.0
    %300 = vmatprep.subr.mxu0 0.0
    %301 = vmatpush1.msra.mxu0 0.0
    %302 = vmatprep.subr.mxu0 0.0
    %303 = vmatpush1.msra.mxu0 0.0
    %304 = vmatprep.subr.mxu0 0.0
    %305 = vmatpush1.msra.mxu0 0.0
    %306 = vmatprep.subr.mxu0 0.0
    %307 = vmatpush1.msra.mxu0 0.0
    %308 = vmatprep.subr.mxu0 0.0
    %309 = vmatpush1.msra.mxu0 0.0
    %310 = vmatprep.subr.mxu0 0.0
    %311 = vmatpush1.msra.mxu0 0.0
    %312 = vmatprep.subr.mxu0 0.0
    %313 = vmatpush1.msra.mxu0 0.0
    %314 = vmatprep.subr.mxu0 0.0
    %315 = vmatpush1.msra.mxu0 0.0
    %316 = vmatprep.subr.mxu0 0.0
    %317 = vmatpush1.msra.mxu0 0.0
    %318 = vmatprep.subr.mxu0 0.0
    %319 = vmatpush1.msra.mxu0 0.0
    %320 = vmatprep.subr.mxu0 0.0
    %321 = vmatpush1.msra.mxu0 0.0
    %322 = vmatprep.subr.mxu0 0.0
    %323 = vmatpush1.msra.mxu0 0.0
    %324 = vmatprep.subr.mxu0 0.0
    %325 = vmatpush1.msra.mxu0 0.0
    %326 = vmatprep.subr.mxu0 0.0
    %327 = vmatpush1.msra.mxu0 0.0
    %328 = vmatprep.subr.mxu0 0.0
    %329 = vmatpush1.msra.mxu0 0.0
    %330 = vmatprep.subr.mxu0 0.0
    %331 = vmatpush1.msra.mxu0 0.0
    %332 = vmatprep.subr.mxu0 0.0
    %333 = vmatpush1.msra.mxu0 0.0
    %334 = vmatprep.subr.mxu0 0.0
    %335 = vmatpush1.msra.mxu0 0.0
    %336 = vmatprep.subr.mxu0 0.0
    %337 = vmatpush1.msra.mxu0 0.0
    %338 = vmatprep.subr.mxu0 0.0
    %339 = vmatpush1.msra.mxu0 0.0
    %340 = vmatprep.subr.mxu0 0.0
    %341 = vmatpush1.msra.mxu0 0.0
    %342 = vmatprep.subr.mxu0 0.0
    %343 = vmatpush1.msra.mxu0 0.0
    %344 = vmatprep.subr.mxu0 0.0
    %345 = vmatpush1.msra.mxu0 0.0
    %346 = vmatprep.subr.mxu0 0.0
    %347 = vmatpush1.msra.mxu0 0.0
    %348 = vmatprep.mubr.f32.mxu0 0.0
    %349 = vmatmul.mubr.f32.gmra.mrb[0].mxu0 %v282
    %v350 = vpop.f32.mrb[0].mxu0
    %v351 = vadd.f32 %v279, %v350
    %v352 = vpop.f32.mrb[0].mxu0
    %353 = vdwg.mxu0
    %vm354 = vcmask 59392
    %355 = vst.msk [vmem:[#allocation2] sm:$0x7] %vm354, %v351
    // Predicated region
    $region30: #{tpu_custom_call.1} parent=1 // pred_check
      _
    $region31: #{tpu_custom_call.1} parent=1 // pred_check_branch
      %357 = sbr.rel (0) target = $region33
    $region32: #{tpu_custom_call.1} parent=1 // pred_region
      %s359 = ssub.s32 64, 64
      %360 = vsyncadd [#allocation3], %s359
      %s362 = sshll.u32 [#allocation2], 4
      %s363 = int_to_ptr.vmem [resolvable:$true] %s362
      %365 = dma.vmem_to_hbm [thread:$0]  %s363, 64, %s7, [#allocation3]
    $region33: #{tpu_custom_call.1} parent=1 // pred_fallthru
      _
    // Predicated region
    $region34: #{tpu_custom_call.1} parent=1 // pred_check
      _
    $region35: #{tpu_custom_call.1} parent=1 // pred_check_branch
      %367 = sbr.rel (0) target = $region37
    $region36: #{tpu_custom_call.1} parent=1 // pred_region
      %368 = dma.done [#allocation3], 64
    $region37: #{tpu_custom_call.1} parent=1 // pred_fallthru
      _
    %369 = vsyncpa [#allocation3], 1

</llo_original>
